<compile_context>
chip_gen: v7x
topology: tpu7x:2x2x1
jax: 0.10.0
libtpu: 0.0.40
codegen_flags: <defaults>
</compile_context>

<pallas_src>
import functools

import jax
import jax.numpy as jnp
from jax.experimental import pallas as pl
from jax.experimental.pallas import tpu as pltpu

HIDDEN = 256
LANE_PAD = 128  # lane-padded width for state_dim (11), and for [mean | value] output


# ----------------------------------------------------------------------------- kernel
def actor_critic_kernel(state_dim, x_ref, w1_ref, w2_ref, wh_ref, b_ref, out_ref):
    # x_ref : (bt, 128)   partial lane block of the (B, state_dim) input
    # w1_ref: (128, 512)  bf16, fused [fc1_w | vfc1_w], row `state_dim` = fused b1
    # w2_ref: (512, 256)  bf16, stacked [fc2_w ; vfc2_w]
    # wh_ref: (512, 128)  bf16, fused head (mean lanes 0..A-1, value lane A)
    # b_ref : (1, 640)    f32, [b2cat(512) | bhead(128)]
    # out   : (bt, 128)   f32, lane-dense [mean | value | zeros]
    bt = x_ref.shape[0]

    # Widen x to a clean (bt, 128) tile: lanes >= state_dim of the partial block
    # are undefined -> explicitly zero them; lane `state_dim` = 1.0 so the
    # folded layer-1 bias row fires.
    lane = jax.lax.broadcasted_iota(jnp.int32, (bt, LANE_PAD), 1)
    x_raw = x_ref[...]
    x = jnp.where(lane < state_dim, x_raw, 0.0)
    x = jnp.where(lane == state_dim, 1.0, x)
    xb = x.astype(jnp.bfloat16)

    # ---- layer 1: actor + critic fused into one MXU push (bias folded) ----
    h1 = jnp.tanh(jnp.dot(xb, w1_ref[...], preferred_element_type=jnp.float32))  # (bt, 512) f32
    ha = h1[:, :HIDDEN].astype(jnp.bfloat16)   # actor hidden
    hv = h1[:, HIDDEN:].astype(jnp.bfloat16)   # critic hidden

    # ---- layer 2: two 256x256 matmuls, no lane concat ----
    b2a = b_ref[:, 0:HIDDEN]
    b2v = b_ref[:, HIDDEN:2 * HIDDEN]
    h2a = jnp.tanh(
        jnp.dot(ha, w2_ref[0:HIDDEN, :], preferred_element_type=jnp.float32) + b2a)
    h2v = jnp.tanh(
        jnp.dot(hv, w2_ref[HIDDEN:, :], preferred_element_type=jnp.float32) + b2v)

    # ---- fused heads: two K=256 dots accumulated in f32, one lane-dense store ----
    bh = b_ref[:, 2 * HIDDEN:2 * HIDDEN + LANE_PAD]
    acc = jnp.dot(h2a.astype(jnp.bfloat16), wh_ref[0:HIDDEN, :],
                  preferred_element_type=jnp.float32)
    acc = acc + jnp.dot(h2v.astype(jnp.bfloat16), wh_ref[HIDDEN:, :],
                        preferred_element_type=jnp.float32)
    out_ref[...] = acc + bh  # lanes [0:A)=mean, lane A=value, rest exactly 0


# ----------------------------------------------------------------------------- params
def _linear_params(key, fan_in, fan_out):
    """PyTorch nn.Linear default init: U(-1/sqrt(fan_in), 1/sqrt(fan_in))."""
    kw, kb = jax.random.split(key)
    bound = 1.0 / jnp.sqrt(fan_in)
    w = jax.random.uniform(kw, (fan_in, fan_out), jnp.float32, -bound, bound)
    b = jax.random.uniform(kb, (fan_out,), jnp.float32, -bound, bound)
    return w, b


def init_actor_critic_params(key, state_dim, action_dim):
    keys = jax.random.split(key, 6)
    p = {}
    p["fc1_w"], p["fc1_b"] = _linear_params(keys[0], state_dim, HIDDEN)
    p["fc2_w"], p["fc2_b"] = _linear_params(keys[1], HIDDEN, HIDDEN)
    p["mean_w"], p["mean_b"] = _linear_params(keys[2], HIDDEN, action_dim)
    p["log_std"] = jnp.zeros((action_dim,), jnp.float32)
    p["vfc1_w"], p["vfc1_b"] = _linear_params(keys[3], state_dim, HIDDEN)
    p["vfc2_w"], p["vfc2_b"] = _linear_params(keys[4], HIDDEN, HIDDEN)
    p["value_w"], p["value_b"] = _linear_params(keys[5], HIDDEN, 1)
    return p


def pack_params(params, state_dim, action_dim):
    """One-time packing: pad, fuse, fold b1, cast MXU operands to bf16."""
    # fused layer 1: (128, 512) with b1 folded into row `state_dim`
    w1cat = jnp.concatenate([params["fc1_w"], params["vfc1_w"]], axis=1)   # (S, 512)
    b1cat = jnp.concatenate([params["fc1_b"], params["vfc1_b"]])           # (512,)
    w1 = jnp.zeros((LANE_PAD, 2 * HIDDEN), jnp.float32)
    w1 = w1.at[:state_dim, :].set(w1cat)
    w1 = w1.at[state_dim, :].set(b1cat)

    # stacked layer-2 weights (actor rows 0..255, critic rows 256..511)
    w2 = jnp.concatenate([params["fc2_w"], params["vfc2_w"]], axis=0)      # (512, 256)
    b2cat = jnp.concatenate([params["fc2_b"], params["vfc2_b"]])           # (512,)

    # fused head: rows 0..255 -> mean lanes 0..A-1, rows 256..511 -> value lane A
    wh = jnp.zeros((2 * HIDDEN, LANE_PAD), jnp.float32)
    wh = wh.at[:HIDDEN, :action_dim].set(params["mean_w"])
    wh = wh.at[HIDDEN:, action_dim:action_dim + 1].set(params["value_w"])
    bh = jnp.zeros((LANE_PAD,), jnp.float32)
    bh = bh.at[:action_dim].set(params["mean_b"])
    bh = bh.at[action_dim].set(params["value_b"][0])

    bias_all = jnp.concatenate([b2cat, bh])[None, :]                       # (1, 640) f32

    return {
        "w1": w1.astype(jnp.bfloat16),
        "w2": w2.astype(jnp.bfloat16),
        "wh": wh.astype(jnp.bfloat16),
        "bias": bias_all,                       # biases stay f32 (added on VPU)
        "std": jnp.exp(params["log_std"]),      # x-independent, computed once
    }


# ----------------------------------------------------------------------------- wrapper
def _batch_tile(batch):
    for t in (256, 128, 64, 32, 16, 8):
        if batch >= t and batch % t == 0:
            return t
    return batch  # full-array block is legal when it equals the batch dim


@jax.jit
def actor_critic_forward(x, packed):
    """Single pallas_call. Returns the lane-dense (B, 128) head output:
    lanes [0:action_dim) = mean, lane action_dim = value, remaining lanes 0.
    Slice mean/value at the consumer; std = packed['std'] (x-independent)."""
    x = x.astype(jnp.float32)
    B, state_dim = x.shape
    bt = _batch_tile(B)
    nsteps = B // bt

    flops = 2 * B * (LANE_PAD * 2 * HIDDEN + 2 * HIDDEN * HIDDEN + 2 * HIDDEN * LANE_PAD)
    bytes_accessed = (
        2 * (LANE_PAD * 2 * HIDDEN + 2 * HIDDEN * HIDDEN + 2 * HIDDEN * LANE_PAD)  # bf16 weights
        + 4 * (2 * HIDDEN + LANE_PAD)  # f32 biases
        + 4 * B * state_dim            # x in
        + 4 * B * LANE_PAD             # out
    )

    kernel = functools.partial(actor_critic_kernel, state_dim)
    out = pl.pallas_call(
        kernel,
        out_shape=jax.ShapeDtypeStruct((B, LANE_PAD), jnp.float32),
        grid=(nsteps,),
        in_specs=[
            pl.BlockSpec((bt, LANE_PAD), lambda i: (i, 0)),              # x (partial lane block, masked in-kernel)
            pl.BlockSpec((LANE_PAD, 2 * HIDDEN), lambda i: (0, 0)),      # w1 (bf16, b1 folded)
            pl.BlockSpec((2 * HIDDEN, HIDDEN), lambda i: (0, 0)),        # w2 stack (bf16)
            pl.BlockSpec((2 * HIDDEN, LANE_PAD), lambda i: (0, 0)),      # fused head (bf16)
            pl.BlockSpec((1, 2 * HIDDEN + LANE_PAD), lambda i: (0, 0)),  # f32 [b2cat | bhead]
        ],
        out_specs=pl.BlockSpec((bt, LANE_PAD), lambda i: (i, 0)),
        compiler_params=pltpu.CompilerParams(
            dimension_semantics=("parallel",)),  # shards batch tiles across v7x's 2 TCs
        cost_estimate=pl.CostEstimate(
            flops=flops,
            transcendentals=4 * B * HIDDEN,  # two tanh layers of 512 lanes each
            bytes_accessed=bytes_accessed,
        ),
    )(x, packed["w1"], packed["w2"], packed["wh"], packed["bias"])
    return out


# ----------------------------------------------------------------------------- reference
def actor_critic_reference(x, params):
    h = jnp.tanh(x @ params["fc1_w"] + params["fc1_b"])
    h = jnp.tanh(h @ params["fc2_w"] + params["fc2_b"])
    mean = h @ params["mean_w"] + params["mean_b"]
    std = jnp.exp(params["log_std"])
    hv = jnp.tanh(x @ params["vfc1_w"] + params["vfc1_b"])
    hv = jnp.tanh(hv @ params["vfc2_w"] + params["vfc2_b"])
    v = hv @ params["value_w"] + params["value_b"]
    return mean, std, v


# ----------------------------------------------------------------------------- main
if __name__ == "__main__":
    # Hopper-v2: observation dim 11, action dim 3.
    state_dim, action_dim, batch = 11, 3, 8

    key = jax.random.PRNGKey(0)
    kx, kp = jax.random.split(key)
    x = jax.random.normal(kx, (batch, state_dim), jnp.float32)
    params = init_actor_critic_params(kp, state_dim, action_dim)

    # One-time parameter packing (hoisted out of the per-call path).
    packed = pack_params(params, state_dim, action_dim)
    packed = jax.tree_util.tree_map(jax.block_until_ready, packed)

    out = actor_critic_forward(x, packed)
    jax.block_until_ready(out)

    # Consumer-side slicing (kept out of the jitted per-call path).
    mean = out[:, :action_dim]
    v = out[:, action_dim:action_dim + 1]
    std = packed["std"]

    mean_ref, std_ref, v_ref = actor_critic_reference(x, params)
    assert mean.shape == (batch, action_dim)
    assert std.shape == (action_dim,)
    assert v.shape == (batch, 1)
    # bf16 MXU-operand weights -> loosened tolerance vs. the pure-f32 reference.
    assert jnp.allclose(mean, mean_ref, atol=5e-2, rtol=5e-2)
    assert jnp.allclose(std, std_ref, atol=1e-6, rtol=1e-6)
    assert jnp.allclose(v, v_ref, atol=5e-2, rtol=5e-2)

    print("KERNEL_OK")
</pallas_src>

<mosaic_0001>
module attributes {stable_mosaic.version = 11 : i64} {
  func.func @actor_critic_kernel(%arg0: i32, %arg1: memref<8x128xf32, #tpu.memory_space<vmem>>, %arg2: memref<128x512xbf16, #tpu.memory_space<vmem>>, %arg3: memref<512x256xbf16, #tpu.memory_space<vmem>>, %arg4: memref<512x128xbf16, #tpu.memory_space<vmem>>, %arg5: memref<1x640xf32, #tpu.memory_space<vmem>>, %arg6: memref<8x128xf32, #tpu.memory_space<vmem>>) attributes {dimension_semantics = [#tpu.dimension_semantics<parallel>], iteration_bounds = array<i64: 1>, scalar_prefetch = 0 : i64, scratch_operands = 0 : i64, tpu.core_type = #tpu.core_type<tc>, window_params = [{transform_indices = @transform_0, window_bounds = array<i64: 8, 128>}, {pipeline_mode = #tpu.pipeline_mode<synchronous>, transform_indices = @transform_1, window_bounds = array<i64: 128, 512>}, {pipeline_mode = #tpu.pipeline_mode<synchronous>, transform_indices = @transform_2, window_bounds = array<i64: 512, 256>}, {pipeline_mode = #tpu.pipeline_mode<synchronous>, transform_indices = @transform_3, window_bounds = array<i64: 512, 128>}, {pipeline_mode = #tpu.pipeline_mode<synchronous>, transform_indices = @transform_4, window_bounds = array<i64: 1, 640>}, {transform_indices = @transform_5, window_bounds = array<i64: 8, 128>}]} {
    %0 = tpu.iota {dimensions = array<i32: 1>} : vector<8x128xi32>
    %c0 = arith.constant 0 : index
    %c0_0 = arith.constant 0 : index
    %1 = vector.load %arg1[%c0, %c0_0] : memref<8x128xf32, #tpu.memory_space<vmem>>, vector<8x128xf32>
    %c11_i32 = arith.constant 11 : i32
    %2 = vector.broadcast %c11_i32 : i32 to vector<8x128xi32>
    %3 = arith.cmpi slt, %0, %2 : vector<8x128xi32>
    %cst = arith.constant 0.000000e+00 : f32
    %4 = vector.broadcast %cst : f32 to vector<8x128xf32>
    %5 = arith.select %3, %1, %4 : vector<8x128xi1>, vector<8x128xf32>
    %c11_i32_1 = arith.constant 11 : i32
    %6 = vector.broadcast %c11_i32_1 : i32 to vector<8x128xi32>
    %7 = arith.cmpi eq, %0, %6 : vector<8x128xi32>
    %cst_2 = arith.constant 1.000000e+00 : f32
    %8 = vector.broadcast %cst_2 : f32 to vector<8x128xf32>
    %9 = arith.select %7, %8, %5 : vector<8x128xi1>, vector<8x128xf32>
    %10 = arith.truncf %9 : vector<8x128xf32> to vector<8x128xbf16>
    %c0_3 = arith.constant 0 : index
    %c0_4 = arith.constant 0 : index
    %11 = vector.load %arg2[%c0_3, %c0_4] : memref<128x512xbf16, #tpu.memory_space<vmem>>, vector<128x512xbf16>
    %cst_5 = arith.constant dense<0.000000e+00> : vector<8x512xf32>
    %12 = tpu.matmul %10, %11, %cst_5 {dimension_numbers = #tpu.dot_dimension_numbers<[1], [0], [0], [1], [0, 0, 1, 1], [], []>} : vector<8x128xbf16>, vector<128x512xbf16>, vector<8x512xf32> -> vector<8x512xf32>
    %13 = math.tanh %12 : vector<8x512xf32>
    %14 = vector.extract_strided_slice %13 {offsets = [0, 0], sizes = [8, 256], strides = [1, 1]} : vector<8x512xf32> to vector<8x256xf32>
    %15 = arith.truncf %14 : vector<8x256xf32> to vector<8x256xbf16>
    %16 = vector.extract_strided_slice %13 {offsets = [0, 256], sizes = [8, 256], strides = [1, 1]} : vector<8x512xf32> to vector<8x256xf32>
    %17 = arith.truncf %16 : vector<8x256xf32> to vector<8x256xbf16>
    %c0_6 = arith.constant 0 : index
    %c0_7 = arith.constant 0 : index
    %18 = vector.load %arg5[%c0_6, %c0_7] : memref<1x640xf32, #tpu.memory_space<vmem>>, vector<1x256xf32>
    %c0_8 = arith.constant 0 : index
    %c256 = arith.constant 256 : index
    %19 = vector.load %arg5[%c0_8, %c256] : memref<1x640xf32, #tpu.memory_space<vmem>>, vector<1x256xf32>
    %c0_9 = arith.constant 0 : index
    %c0_10 = arith.constant 0 : index
    %20 = vector.load %arg3[%c0_9, %c0_10] : memref<512x256xbf16, #tpu.memory_space<vmem>>, vector<256x256xbf16>
    %cst_11 = arith.constant dense<0.000000e+00> : vector<8x256xf32>
    %21 = tpu.matmul %15, %20, %cst_11 {dimension_numbers = #tpu.dot_dimension_numbers<[1], [0], [0], [1], [0, 0, 1, 1], [], []>} : vector<8x256xbf16>, vector<256x256xbf16>, vector<8x256xf32> -> vector<8x256xf32>
    %22 = vector.broadcast %18 : vector<1x256xf32> to vector<8x256xf32>
    %23 = arith.addf %21, %22 : vector<8x256xf32>
    %24 = math.tanh %23 : vector<8x256xf32>
    %c256_12 = arith.constant 256 : index
    %c0_13 = arith.constant 0 : index
    %25 = vector.load %arg3[%c256_12, %c0_13] : memref<512x256xbf16, #tpu.memory_space<vmem>>, vector<256x256xbf16>
    %cst_14 = arith.constant dense<0.000000e+00> : vector<8x256xf32>
    %26 = tpu.matmul %17, %25, %cst_14 {dimension_numbers = #tpu.dot_dimension_numbers<[1], [0], [0], [1], [0, 0, 1, 1], [], []>} : vector<8x256xbf16>, vector<256x256xbf16>, vector<8x256xf32> -> vector<8x256xf32>
    %27 = vector.broadcast %19 : vector<1x256xf32> to vector<8x256xf32>
    %28 = arith.addf %26, %27 : vector<8x256xf32>
    %29 = math.tanh %28 : vector<8x256xf32>
    %c0_15 = arith.constant 0 : index
    %c512 = arith.constant 512 : index
    %30 = vector.load %arg5[%c0_15, %c512] : memref<1x640xf32, #tpu.memory_space<vmem>>, vector<1x128xf32>
    %31 = arith.truncf %24 : vector<8x256xf32> to vector<8x256xbf16>
    %c0_16 = arith.constant 0 : index
    %c0_17 = arith.constant 0 : index
    %32 = vector.load %arg4[%c0_16, %c0_17] : memref<512x128xbf16, #tpu.memory_space<vmem>>, vector<256x128xbf16>
    %cst_18 = arith.constant dense<0.000000e+00> : vector<8x128xf32>
    %33 = tpu.matmul %31, %32, %cst_18 {dimension_numbers = #tpu.dot_dimension_numbers<[1], [0], [0], [1], [0, 0, 1, 1], [], []>} : vector<8x256xbf16>, vector<256x128xbf16>, vector<8x128xf32> -> vector<8x128xf32>
    %34 = arith.truncf %29 : vector<8x256xf32> to vector<8x256xbf16>
    %c256_19 = arith.constant 256 : index
    %c0_20 = arith.constant 0 : index
    %35 = vector.load %arg4[%c256_19, %c0_20] : memref<512x128xbf16, #tpu.memory_space<vmem>>, vector<256x128xbf16>
    %cst_21 = arith.constant dense<0.000000e+00> : vector<8x128xf32>
    %36 = tpu.matmul %34, %35, %cst_21 {dimension_numbers = #tpu.dot_dimension_numbers<[1], [0], [0], [1], [0, 0, 1, 1], [], []>} : vector<8x256xbf16>, vector<256x128xbf16>, vector<8x128xf32> -> vector<8x128xf32>
    %37 = arith.addf %33, %36 : vector<8x128xf32>
    %38 = vector.broadcast %30 : vector<1x128xf32> to vector<8x128xf32>
    %39 = arith.addf %37, %38 : vector<8x128xf32>
    %c0_22 = arith.constant 0 : index
    %c0_23 = arith.constant 0 : index
    %40 = vector.load %arg6[%c0_22, %c0_23] : memref<8x128xf32, #tpu.memory_space<vmem>>, vector<8x128xf32>
    tpu.vector_store %arg6[%c0_22, %c0_23], %39 {strides = array<i32>} : memref<8x128xf32, #tpu.memory_space<vmem>>, vector<8x128xf32>,
    return
  }
  func.func @transform_0(%arg0: i32) -> (i32, i32) {
    %c0_i32 = arith.constant 0 : i32
    %c0_i32_0 = arith.constant 0 : i32
    return %arg0, %c0_i32 : i32, i32
  }
  func.func @transform_1(%arg0: i32) -> (i32, i32) {
    %c0_i32 = arith.constant 0 : i32
    %c0_i32_0 = arith.constant 0 : i32
    %c0_i32_1 = arith.constant 0 : i32
    return %c0_i32, %c0_i32_0 : i32, i32
  }
  func.func @transform_2(%arg0: i32) -> (i32, i32) {
    %c0_i32 = arith.constant 0 : i32
    %c0_i32_0 = arith.constant 0 : i32
    %c0_i32_1 = arith.constant 0 : i32
    return %c0_i32, %c0_i32_0 : i32, i32
  }
  func.func @transform_3(%arg0: i32) -> (i32, i32) {
    %c0_i32 = arith.constant 0 : i32
    %c0_i32_0 = arith.constant 0 : i32
    %c0_i32_1 = arith.constant 0 : i32
    return %c0_i32, %c0_i32_0 : i32, i32
  }
  func.func @transform_4(%arg0: i32) -> (i32, i32) {
    %c0_i32 = arith.constant 0 : i32
    %c0_i32_0 = arith.constant 0 : i32
    %c0_i32_1 = arith.constant 0 : i32
    return %c0_i32, %c0_i32_0 : i32, i32
  }
  func.func @transform_5(%arg0: i32) -> (i32, i32) {
    %c0_i32 = arith.constant 0 : i32
    %c0_i32_0 = arith.constant 0 : i32
    return %arg0, %c0_i32 : i32, i32
  }
}

</mosaic_0001>

<llo_original>
// kernel: actor_critic_forward.1
$region0: #{actor_critic_forward.1}
  #allocation0 [shape = 'u32[]', space=smem, size = 0x4, offset = 0x4, fixed_abs, tag = 'smem constant byte address 0x4 - core index']
  #allocation1 [shape = 'u32[144,128]{1,0:T(1,128)}', space=vmem, size = 0x12000, scoped, tag = 'internal scratch']
  %s0 = inlined_call_operand.hbm [shape: f32[8,11], index: 0, kind: input, shape index: {}]
  %s1 = inlined_call_operand.hbm [shape: bf16[128,512], index: 1, kind: input, shape index: {}]
  %s2 = inlined_call_operand.hbm [shape: bf16[512,256], index: 2, kind: input, shape index: {}]
  %s3 = inlined_call_operand.hbm [shape: bf16[512,128], index: 3, kind: input, shape index: {}]
  %s4 = inlined_call_operand.hbm [shape: f32[1,640], index: 4, kind: input, shape index: {}]
  %s5 = inlined_call_operand.hbm [shape: f32[8,128], index: 5, kind: output, shape index: {}]
  %s6 = sld [smem:[#allocation0]]
  $region50: #{actor_critic_forward.1} parent=0
    _
  %s8 = ssub.s32 1, %s6
  %s9 = scalar_select 0, %s8, %s6
  $region1: #{actor_critic_forward.1} parent=0
    #allocation2 [shape = 'u8[4096]{0}', space=vmem, size = 0x1000, scoped, tag = 'input window, operand 0, single buffered']
    #allocation3 [shape = 's32[1]{0}', space=sflag, size = 0x4, scoped, tag = 'scoped memory for actor_critic_forward.1']
    #allocation4 [shape = 's32[1]{0}', space=sflag, size = 0x4, scoped, tag = 'scoped memory for actor_critic_forward.1']
    #allocation5 [shape = 'u8[131072]{0}', space=vmem, size = 0x20000, scoped, tag = 'input window, operand 1, single buffered']
    #allocation6 [shape = 's32[1]{0}', space=sflag, size = 0x4, scoped, tag = 'scoped memory for actor_critic_forward.1']
    #allocation7 [shape = 'u8[262144]{0}', space=vmem, size = 0x40000, scoped, tag = 'input window, operand 2, single buffered']
    #allocation8 [shape = 'u8[131072]{0}', space=vmem, size = 0x20000, scoped, tag = 'input window, operand 3, single buffered']
    #allocation9 [shape = 's32[1]{0}', space=sflag, size = 0x4, scoped, tag = 'scoped memory for actor_critic_forward.1']
    #allocation10 [shape = 'u8[2560]{0}', space=vmem, size = 0xc00, scoped, tag = 'input window, operand 4, single buffered']
    #allocation11 [shape = 'u8[4096]{0}', space=vmem, size = 0x1000, scoped, tag = 'output window, operand 0, single buffered']
    %10 = vsyncpa [#allocation3], 0
    %11 = vsyncpa [#allocation6], 0
    %12 = vsyncpa [#allocation9], 0
    %13 = vsyncpa [#allocation4], 0
    // Predicated region
    $region2: #{actor_critic_forward.1} parent=1 // pred_check
      _
    $region3: #{actor_critic_forward.1} parent=1 // pred_check_branch
      %15 = sbr.rel (0) target = $region5
    $region4: #{actor_critic_forward.1} parent=1 // pred_region
      %s17 = ssub.s32 128, 128
      %18 = vsyncadd [#allocation3], %s17
      %s20 = sshll.u32 [#allocation2], 4
      %s21 = int_to_ptr.vmem [resolvable:$true] %s20
      %23 = dma.hbm_to_vmem [thread:$0]  %s0, 128, %s21, [#allocation3]
    $region5: #{actor_critic_forward.1} parent=1 // pred_fallthru
      _
    // Predicated region
    $region6: #{actor_critic_forward.1} parent=1 // pred_check
      _
    $region7: #{actor_critic_forward.1} parent=1 // pred_check_branch
      %25 = sbr.rel (0) target = $region9
    $region8: #{actor_critic_forward.1} parent=1 // pred_region
      %s27 = ssub.s32 4096, 4096
      %28 = vsyncadd [#allocation6], %s27
      %s29 = sshll.u32 [#allocation5], 4
      %s30 = int_to_ptr.vmem [resolvable:$true] %s29
      %35 = dma.hbm_to_vmem [thread:$0]  %s1, 4096, %s30, [#allocation6], 256, 256, 16
    $region9: #{actor_critic_forward.1} parent=1 // pred_fallthru
      _
    // Predicated region
    $region10: #{actor_critic_forward.1} parent=1 // pred_check
      _
    $region11: #{actor_critic_forward.1} parent=1 // pred_check_branch
      %37 = sbr.rel (0) target = $region13
    $region12: #{actor_critic_forward.1} parent=1 // pred_region
      %s39 = ssub.s32 8192, 8192
      %40 = vsyncadd [#allocation6], %s39
      %s41 = sshll.u32 [#allocation7], 4
      %s42 = int_to_ptr.vmem [resolvable:$true] %s41
      %47 = dma.hbm_to_vmem [thread:$0]  %s2, 8192, %s42, [#allocation6], 128, 128, 8
    $region13: #{actor_critic_forward.1} parent=1 // pred_fallthru
      _
    // Predicated region
    $region14: #{actor_critic_forward.1} parent=1 // pred_check
      _
    $region15: #{actor_critic_forward.1} parent=1 // pred_check_branch
      %49 = sbr.rel (0) target = $region17
    $region16: #{actor_critic_forward.1} parent=1 // pred_region
      %s51 = ssub.s32 4096, 4096
      %52 = vsyncadd [#allocation9], %s51
      %s53 = sshll.u32 [#allocation8], 4
      %s54 = int_to_ptr.vmem [resolvable:$true] %s53
      %59 = dma.hbm_to_vmem [thread:$0]  %s3, 4096, %s54, [#allocation9], 64, 64, 4
    $region17: #{actor_critic_forward.1} parent=1 // pred_fallthru
      _
    // Predicated region
    $region18: #{actor_critic_forward.1} parent=1 // pred_check
      _
    $region19: #{actor_critic_forward.1} parent=1 // pred_check_branch
      %61 = sbr.rel (0) target = $region21
    $region20: #{actor_critic_forward.1} parent=1 // pred_region
      %s63 = ssub.s32 80, 80
      %64 = vsyncadd [#allocation9], %s63
      %s66 = sshll.u32 [#allocation10], 4
      %s67 = int_to_ptr.vmem [resolvable:$true] %s66
      %69 = dma.hbm_to_vmem [thread:$0]  %s4, 80, %s67, [#allocation9]
    $region21: #{actor_critic_forward.1} parent=1 // pred_fallthru
      _
    // Predicated region
    $region22: #{actor_critic_forward.1} parent=1 // pred_check
      _
    $region23: #{actor_critic_forward.1} parent=1 // pred_check_branch
      %71 = sbr.rel (0) target = $region25
    $region24: #{actor_critic_forward.1} parent=1 // pred_region
      %72 = dma.done [#allocation3], 128
    $region25: #{actor_critic_forward.1} parent=1 // pred_fallthru
      _
    // Predicated region
    $region26: #{actor_critic_forward.1} parent=1 // pred_check
      _
    $region27: #{actor_critic_forward.1} parent=1 // pred_check_branch
      %74 = sbr.rel (0) target = $region29
    $region28: #{actor_critic_forward.1} parent=1 // pred_region
      %75 = dma.done [#allocation6], 4096
    $region29: #{actor_critic_forward.1} parent=1 // pred_fallthru
      _
    // Predicated region
    $region30: #{actor_critic_forward.1} parent=1 // pred_check
      _
    $region31: #{actor_critic_forward.1} parent=1 // pred_check_branch
      %77 = sbr.rel (0) target = $region33
    $region32: #{actor_critic_forward.1} parent=1 // pred_region
      %78 = dma.done [#allocation6], 8192
    $region33: #{actor_critic_forward.1} parent=1 // pred_fallthru
      _
    // Predicated region
    $region34: #{actor_critic_forward.1} parent=1 // pred_check
      _
    $region35: #{actor_critic_forward.1} parent=1 // pred_check_branch
      %80 = sbr.rel (0) target = $region37
    $region36: #{actor_critic_forward.1} parent=1 // pred_region
      %81 = dma.done [#allocation9], 4096
    $region37: #{actor_critic_forward.1} parent=1 // pred_fallthru
      _
    // Predicated region
    $region38: #{actor_critic_forward.1} parent=1 // pred_check
      _
    $region39: #{actor_critic_forward.1} parent=1 // pred_check_branch
      %83 = sbr.rel (0) target = $region41
    $region40: #{actor_critic_forward.1} parent=1 // pred_region
      %84 = dma.done [#allocation9], 80
    $region41: #{actor_critic_forward.1} parent=1 // pred_fallthru
      _
    %v86 = vlaneseq
    %v87 = vand.u32 %v86, 127
    %v88 = vld [vmem:[#allocation2] sm:$0xff]
    %vm89 = vcmp.lt.s32.totalorder %v87, 11
    %v90 = vsel %vm89, %v88, 0.0
    %vm91 = vcmp.eq.s32.totalorder %v87, 11
    %v92 = vsel %vm91, 1.0, %v90
    %v93 = vpack.c.bf16 %v92, %v92
    %v94 = vld [vmem:[#allocation5] sm:$0xff]
    %v95 = vld [vmem:[#allocation5 + $0x8] sm:$0xff]
    %v96 = vld [vmem:[#allocation5 + $0x10] sm:$0xff]
    %v97 = vld [vmem:[#allocation5 + $0x18] sm:$0xff]
    %v98 = vld [vmem:[#allocation5 + $0x20] sm:$0xff]
    %v99 = vld [vmem:[#allocation5 + $0x28] sm:$0xff]
    %v100 = vld [vmem:[#allocation5 + $0x30] sm:$0xff]
    %v101 = vld [vmem:[#allocation5 + $0x38] sm:$0xff]
    %v102 = vld [vmem:[#allocation5 + $0x40] sm:$0xff]
    %v103 = vld [vmem:[#allocation5 + $0x48] sm:$0xff]
    %v104 = vld [vmem:[#allocation5 + $0x50] sm:$0xff]
    %v105 = vld [vmem:[#allocation5 + $0x58] sm:$0xff]
    %v106 = vld [vmem:[#allocation5 + $0x60] sm:$0xff]
    %v107 = vld [vmem:[#allocation5 + $0x68] sm:$0xff]
    %v108 = vld [vmem:[#allocation5 + $0x70] sm:$0xff]
    %v109 = vld [vmem:[#allocation5 + $0x78] sm:$0xff]
    %v110 = vld [vmem:[#allocation5 + $0x80] sm:$0xff]
    %v111 = vld [vmem:[#allocation5 + $0x88] sm:$0xff]
    %v112 = vld [vmem:[#allocation5 + $0x90] sm:$0xff]
    %v113 = vld [vmem:[#allocation5 + $0x98] sm:$0xff]
    %v114 = vld [vmem:[#allocation5 + $0xa0] sm:$0xff]
    %v115 = vld [vmem:[#allocation5 + $0xa8] sm:$0xff]
    %v116 = vld [vmem:[#allocation5 + $0xb0] sm:$0xff]
    %v117 = vld [vmem:[#allocation5 + $0xb8] sm:$0xff]
    %v118 = vld [vmem:[#allocation5 + $0xc0] sm:$0xff]
    %v119 = vld [vmem:[#allocation5 + $0xc8] sm:$0xff]
    %v120 = vld [vmem:[#allocation5 + $0xd0] sm:$0xff]
    %v121 = vld [vmem:[#allocation5 + $0xd8] sm:$0xff]
    %v122 = vld [vmem:[#allocation5 + $0xe0] sm:$0xff]
    %v123 = vld [vmem:[#allocation5 + $0xe8] sm:$0xff]
    %v124 = vld [vmem:[#allocation5 + $0xf0] sm:$0xff]
    %v125 = vld [vmem:[#allocation5 + $0xf8] sm:$0xff]
    %v158 = vunpack.c.l.b16 %v94
    %v159 = vunpack.c.h.b16 %v94
    %v160 = vunpack.c.l.b16 %v95
    %v161 = vunpack.c.h.b16 %v95
    %v162 = vunpack.c.l.b16 %v96
    %v163 = vunpack.c.h.b16 %v96
    %v164 = vunpack.c.l.b16 %v97
    %v165 = vunpack.c.h.b16 %v97
    %v166 = vunpack.c.l.b16 %v98
    %v167 = vunpack.c.h.b16 %v98
    %v168 = vunpack.c.l.b16 %v99
    %v169 = vunpack.c.h.b16 %v99
    %v170 = vunpack.c.l.b16 %v100
    %v171 = vunpack.c.h.b16 %v100
    %v172 = vunpack.c.l.b16 %v101
    %v173 = vunpack.c.h.b16 %v101
    %v174 = vunpack.c.l.b16 %v102
    %v175 = vunpack.c.h.b16 %v102
    %v176 = vunpack.c.l.b16 %v103
    %v177 = vunpack.c.h.b16 %v103
    %v178 = vunpack.c.l.b16 %v104
    %v179 = vunpack.c.h.b16 %v104
    %v180 = vunpack.c.l.b16 %v105
    %v181 = vunpack.c.h.b16 %v105
    %v182 = vunpack.c.l.b16 %v106
    %v183 = vunpack.c.h.b16 %v106
    %v184 = vunpack.c.l.b16 %v107
    %v185 = vunpack.c.h.b16 %v107
    %v186 = vunpack.c.l.b16 %v108
    %v187 = vunpack.c.h.b16 %v108
    %v188 = vunpack.c.l.b16 %v109
    %v189 = vunpack.c.h.b16 %v109
    %v190 = vunpack.c.l.b16 %v110
    %v191 = vunpack.c.h.b16 %v110
    %v192 = vunpack.c.l.b16 %v111
    %v193 = vunpack.c.h.b16 %v111
    %v194 = vunpack.c.l.b16 %v112
    %v195 = vunpack.c.h.b16 %v112
    %v196 = vunpack.c.l.b16 %v113
    %v197 = vunpack.c.h.b16 %v113
    %v198 = vunpack.c.l.b16 %v114
    %v199 = vunpack.c.h.b16 %v114
    %v200 = vunpack.c.l.b16 %v115
    %v201 = vunpack.c.h.b16 %v115
    %v202 = vunpack.c.l.b16 %v116
    %v203 = vunpack.c.h.b16 %v116
    %v204 = vunpack.c.l.b16 %v117
    %v205 = vunpack.c.h.b16 %v117
    %v206 = vunpack.c.l.b16 %v118
    %v207 = vunpack.c.h.b16 %v118
    %v208 = vunpack.c.l.b16 %v119
    %v209 = vunpack.c.h.b16 %v119
    %v210 = vunpack.c.l.b16 %v120
    %v211 = vunpack.c.h.b16 %v120
    %v212 = vunpack.c.l.b16 %v121
    %v213 = vunpack.c.h.b16 %v121
    %v214 = vunpack.c.l.b16 %v122
    %v215 = vunpack.c.h.b16 %v122
    %v216 = vunpack.c.l.b16 %v123
    %v217 = vunpack.c.h.b16 %v123
    %v218 = vunpack.c.l.b16 %v124
    %v219 = vunpack.c.h.b16 %v124
    %v220 = vunpack.c.l.b16 %v125
    %v221 = vunpack.c.h.b16 %v125
    %v222 = vpack.c.b16 %v162, %v158
    %v223 = vpack.c.b16 %v163, %v159
    %v224 = vpack.c.b16 %v164, %v160
    %v225 = vpack.c.b16 %v165, %v161
    %v226 = vpack.c.b16 %v170, %v166
    %v227 = vpack.c.b16 %v171, %v167
    %v228 = vpack.c.b16 %v172, %v168
    %v229 = vpack.c.b16 %v173, %v169
    %v230 = vpack.c.b16 %v178, %v174
    %v231 = vpack.c.b16 %v179, %v175
    %v232 = vpack.c.b16 %v180, %v176
    %v233 = vpack.c.b16 %v181, %v177
    %v234 = vpack.c.b16 %v186, %v182
    %v235 = vpack.c.b16 %v187, %v183
    %v236 = vpack.c.b16 %v188, %v184
    %v237 = vpack.c.b16 %v189, %v185
    %v238 = vpack.c.b16 %v194, %v190
    %v239 = vpack.c.b16 %v195, %v191
    %v240 = vpack.c.b16 %v196, %v192
    %v241 = vpack.c.b16 %v197, %v193
    %v242 = vpack.c.b16 %v202, %v198
    %v243 = vpack.c.b16 %v203, %v199
    %v244 = vpack.c.b16 %v204, %v200
    %v245 = vpack.c.b16 %v205, %v201
    %v246 = vpack.c.b16 %v210, %v206
    %v247 = vpack.c.b16 %v211, %v207
    %v248 = vpack.c.b16 %v212, %v208
    %v249 = vpack.c.b16 %v213, %v209
    %v250 = vpack.c.b16 %v218, %v214
    %v251 = vpack.c.b16 %v219, %v215
    %v252 = vpack.c.b16 %v220, %v216
    %v253 = vpack.c.b16 %v221, %v217
    %286 = vmatprep.subr.bf16.mxu0 %v223
    %287 = vmatpush1.bf16.msra.mxu0 %v222
    %288 = vmatprep.subr.bf16.mxu0 %v227
    %289 = vmatpush1.bf16.msra.mxu0 %v226
    %290 = vmatprep.subr.bf16.mxu0 %v231
    %291 = vmatpush1.bf16.msra.mxu0 %v230
    %292 = vmatprep.subr.bf16.mxu0 %v235
    %293 = vmatpush1.bf16.msra.mxu0 %v234
    %294 = vmatprep.subr.bf16.mxu0 %v239
    %295 = vmatpush1.bf16.msra.mxu0 %v238
    %296 = vmatprep.subr.bf16.mxu0 %v243
    %297 = vmatpush1.bf16.msra.mxu0 %v242
    %298 = vmatprep.subr.bf16.mxu0 %v247
    %299 = vmatpush1.bf16.msra.mxu0 %v246
    %300 = vmatprep.subr.bf16.mxu0 %v251
    %301 = vmatpush1.bf16.msra.mxu0 %v250
    %302 = vmatprep.subr.bf16.mxu0 0
    %303 = vmatpush1.bf16.msra.mxu0 0
    %304 = vmatprep.subr.bf16.mxu0 0
    %305 = vmatpush1.bf16.msra.mxu0 0
    %306 = vmatprep.subr.bf16.mxu0 0
    %307 = vmatpush1.bf16.msra.mxu0 0
    %308 = vmatprep.subr.bf16.mxu0 0
    %309 = vmatpush1.bf16.msra.mxu0 0
    %310 = vmatprep.subr.bf16.mxu0 0
    %311 = vmatpush1.bf16.msra.mxu0 0
    %312 = vmatprep.subr.bf16.mxu0 0
    %313 = vmatpush1.bf16.msra.mxu0 0
    %314 = vmatprep.subr.bf16.mxu0 0
    %315 = vmatpush1.bf16.msra.mxu0 0
    %316 = vmatprep.subr.bf16.mxu0 0
    %317 = vmatpush1.bf16.msra.mxu0 0
    %318 = vmatprep.mubr.bf16.mxu0 0
    %319 = vmatmul.mubr.bf16.gmra.mrb[0].mxu0 %v93
    %v320 = vpop.f32.mrb[0].mxu0
    %v321 = vadd.f32 0.0, %v320
    %v322 = vpop.f32.mrb[0].mxu0
    %v323 = vadd.f32 0.0, %v322
    %v324 = vpop.f32.mrb[0].mxu0
    %v325 = vpop.f32.mrb[0].mxu0
    %326 = vdwg.mxu0
    %327 = vmatprep.subr.bf16.mxu0 %v225
    %328 = vmatpush1.bf16.msra.mxu0 %v224
    %329 = vmatprep.subr.bf16.mxu0 %v229
    %330 = vmatpush1.bf16.msra.mxu0 %v228
    %331 = vmatprep.subr.bf16.mxu0 %v233
    %332 = vmatpush1.bf16.msra.mxu0 %v232
    %333 = vmatprep.subr.bf16.mxu0 %v237
    %334 = vmatpush1.bf16.msra.mxu0 %v236
    %335 = vmatprep.subr.bf16.mxu0 %v241
    %336 = vmatpush1.bf16.msra.mxu0 %v240
    %337 = vmatprep.subr.bf16.mxu0 %v245
    %338 = vmatpush1.bf16.msra.mxu0 %v244
    %339 = vmatprep.subr.bf16.mxu0 %v249
    %340 = vmatpush1.bf16.msra.mxu0 %v248
    %341 = vmatprep.subr.bf16.mxu0 %v253
    %342 = vmatpush1.bf16.msra.mxu0 %v252
    %343 = vmatprep.subr.bf16.mxu0 0
    %344 = vmatpush1.bf16.msra.mxu0 0
    %345 = vmatprep.subr.bf16.mxu0 0
    %346 = vmatpush1.bf16.msra.mxu0 0
    %347 = vmatprep.subr.bf16.mxu0 0
    %348 = vmatpush1.bf16.msra.mxu0 0
    %349 = vmatprep.subr.bf16.mxu0 0
    %350 = vmatpush1.bf16.msra.mxu0 0
    %351 = vmatprep.subr.bf16.mxu0 0
    %352 = vmatpush1.bf16.msra.mxu0 0
    %353 = vmatprep.subr.bf16.mxu0 0
    %354 = vmatpush1.bf16.msra.mxu0 0
    %355 = vmatprep.subr.bf16.mxu0 0
    %356 = vmatpush1.bf16.msra.mxu0 0
    %357 = vmatprep.subr.bf16.mxu0 0
    %358 = vmatpush1.bf16.msra.mxu0 0
    %359 = vmatprep.mubr.bf16.mxu0 0
    %360 = vmatmul.mubr.bf16.gmra.mrb[0].mxu0 %v93
    %v361 = vpop.f32.mrb[0].mxu0
    %v362 = vadd.f32 0.0, %v361
    %v363 = vpop.f32.mrb[0].mxu0
    %v364 = vadd.f32 0.0, %v363
    %v365 = vpop.f32.mrb[0].mxu0
    %v366 = vpop.f32.mrb[0].mxu0
    %367 = vdwg.mxu0
    %v368 = vtanh.pop %v321
    %v369 = vtanh.pop %v323
    %v370 = vtanh.pop %v362
    %v371 = vtanh.pop %v364
    %v372 = vpack.c.bf16 %v368, %v368
    %v373 = vpack.c.bf16 %v369, %v369
    %v374 = vpack.c.bf16 %v370, %v370
    %v375 = vpack.c.bf16 %v371, %v371
    %v376 = vld [vmem:[#allocation10] sm:$0x3]
    %v377 = vld [vmem:[#allocation10 + $0x2] sm:$0x3]
    %v378 = vld [vmem:[#allocation7] sm:$0xff]
    %v379 = vld [vmem:[#allocation7 + $0x8] sm:$0xff]
    %v380 = vld [vmem:[#allocation7 + $0x10] sm:$0xff]
    %v381 = vld [vmem:[#allocation7 + $0x18] sm:$0xff]
    %v382 = vld [vmem:[#allocation7 + $0x20] sm:$0xff]
    %v383 = vld [vmem:[#allocation7 + $0x28] sm:$0xff]
    %v384 = vld [vmem:[#allocation7 + $0x30] sm:$0xff]
    %v385 = vld [vmem:[#allocation7 + $0x38] sm:$0xff]
    %v386 = vld [vmem:[#allocation7 + $0x40] sm:$0xff]
    %v387 = vld [vmem:[#allocation7 + $0x48] sm:$0xff]
    %v388 = vld [vmem:[#allocation7 + $0x50] sm:$0xff]
    %v389 = vld [vmem:[#allocation7 + $0x58] sm:$0xff]
    %v390 = vld [vmem:[#allocation7 + $0x60] sm:$0xff]
    %v391 = vld [vmem:[#allocation7 + $0x68] sm:$0xff]
    %v392 = vld [vmem:[#allocation7 + $0x70] sm:$0xff]
    %v393 = vld [vmem:[#allocation7 + $0x78] sm:$0xff]
    %v394 = vld [vmem:[#allocation7 + $0x80] sm:$0xff]
    %v395 = vld [vmem:[#allocation7 + $0x88] sm:$0xff]
    %v396 = vld [vmem:[#allocation7 + $0x90] sm:$0xff]
    %v397 = vld [vmem:[#allocation7 + $0x98] sm:$0xff]
    %v398 = vld [vmem:[#allocation7 + $0xa0] sm:$0xff]
    %v399 = vld [vmem:[#allocation7 + $0xa8] sm:$0xff]
    %v400 = vld [vmem:[#allocation7 + $0xb0] sm:$0xff]
    %v401 = vld [vmem:[#allocation7 + $0xb8] sm:$0xff]
    %v402 = vld [vmem:[#allocation7 + $0xc0] sm:$0xff]
    %v403 = vld [vmem:[#allocation7 + $0xc8] sm:$0xff]
    %v404 = vld [vmem:[#allocation7 + $0xd0] sm:$0xff]
    %v405 = vld [vmem:[#allocation7 + $0xd8] sm:$0xff]
    %v406 = vld [vmem:[#allocation7 + $0xe0] sm:$0xff]
    %v407 = vld [vmem:[#allocation7 + $0xe8] sm:$0xff]
    %v408 = vld [vmem:[#allocation7 + $0xf0] sm:$0xff]
    %v409 = vld [vmem:[#allocation7 + $0xf8] sm:$0xff]
    %v411 = vlaneseq
    %v412 = vshrl.u32 %v411, 7
    %v413 = vsub.s32 0, %v412
    %v414 = vrot.slane %v376, %v413
    %v415 = vlaneseq
    %v416 = vshrl.u32 %v415, 7
    %v417 = vsub.s32 1, %v416
    %v418 = vrot.slane %v376, %v417
    %v453 = vunpack.c.l.b16 %v378
    %v454 = vunpack.c.h.b16 %v378
    %v455 = vunpack.c.l.b16 %v379
    %v456 = vunpack.c.h.b16 %v379
    %v457 = vunpack.c.l.b16 %v380
    %v458 = vunpack.c.h.b16 %v380
    %v459 = vunpack.c.l.b16 %v381
    %v460 = vunpack.c.h.b16 %v381
    %v461 = vunpack.c.l.b16 %v382
    %v462 = vunpack.c.h.b16 %v382
    %v463 = vunpack.c.l.b16 %v383
    %v464 = vunpack.c.h.b16 %v383
    %v465 = vunpack.c.l.b16 %v384
    %v466 = vunpack.c.h.b16 %v384
    %v467 = vunpack.c.l.b16 %v385
    %v468 = vunpack.c.h.b16 %v385
    %v469 = vunpack.c.l.b16 %v386
    %v470 = vunpack.c.h.b16 %v386
    %v471 = vunpack.c.l.b16 %v387
    %v472 = vunpack.c.h.b16 %v387
    %v473 = vunpack.c.l.b16 %v388
    %v474 = vunpack.c.h.b16 %v388
    %v475 = vunpack.c.l.b16 %v389
    %v476 = vunpack.c.h.b16 %v389
    %v477 = vunpack.c.l.b16 %v390
    %v478 = vunpack.c.h.b16 %v390
    %v479 = vunpack.c.l.b16 %v391
    %v480 = vunpack.c.h.b16 %v391
    %v481 = vunpack.c.l.b16 %v392
    %v482 = vunpack.c.h.b16 %v392
    %v483 = vunpack.c.l.b16 %v393
    %v484 = vunpack.c.h.b16 %v393
    %v485 = vunpack.c.l.b16 %v394
    %v486 = vunpack.c.h.b16 %v394
    %v487 = vunpack.c.l.b16 %v395
    %v488 = vunpack.c.h.b16 %v395
    %v489 = vunpack.c.l.b16 %v396
    %v490 = vunpack.c.h.b16 %v396
    %v491 = vunpack.c.l.b16 %v397
    %v492 = vunpack.c.h.b16 %v397
    %v493 = vunpack.c.l.b16 %v398
    %v494 = vunpack.c.h.b16 %v398
    %v495 = vunpack.c.l.b16 %v399
    %v496 = vunpack.c.h.b16 %v399
    %v497 = vunpack.c.l.b16 %v400
    %v498 = vunpack.c.h.b16 %v400
    %v499 = vunpack.c.l.b16 %v401
    %v500 = vunpack.c.h.b16 %v401
    %v501 = vunpack.c.l.b16 %v402
    %v502 = vunpack.c.h.b16 %v402
    %v503 = vunpack.c.l.b16 %v403
    %v504 = vunpack.c.h.b16 %v403
    %v505 = vunpack.c.l.b16 %v404
    %v506 = vunpack.c.h.b16 %v404
    %v507 = vunpack.c.l.b16 %v405
    %v508 = vunpack.c.h.b16 %v405
    %v509 = vunpack.c.l.b16 %v406
    %v510 = vunpack.c.h.b16 %v406
    %v511 = vunpack.c.l.b16 %v407
    %v512 = vunpack.c.h.b16 %v407
    %v513 = vunpack.c.l.b16 %v408
    %v514 = vunpack.c.h.b16 %v408
    %v515 = vunpack.c.l.b16 %v409
    %v516 = vunpack.c.h.b16 %v409
    %v517 = vpack.c.b16 %v455, %v453
    %v518 = vpack.c.b16 %v456, %v454
    %v519 = vpack.c.b16 %v459, %v457
    %v520 = vpack.c.b16 %v460, %v458
    %v521 = vpack.c.b16 %v463, %v461
    %v522 = vpack.c.b16 %v464, %v462
    %v523 = vpack.c.b16 %v467, %v465
    %v524 = vpack.c.b16 %v468, %v466
    %v525 = vpack.c.b16 %v471, %v469
    %v526 = vpack.c.b16 %v472, %v470
    %v527 = vpack.c.b16 %v475, %v473
    %v528 = vpack.c.b16 %v476, %v474
    %v529 = vpack.c.b16 %v479, %v477
    %v530 = vpack.c.b16 %v480, %v478
    %v531 = vpack.c.b16 %v483, %v481
    %v532 = vpack.c.b16 %v484, %v482
    %v533 = vpack.c.b16 %v487, %v485
    %v534 = vpack.c.b16 %v488, %v486
    %v535 = vpack.c.b16 %v491, %v489
    %v536 = vpack.c.b16 %v492, %v490
    %v537 = vpack.c.b16 %v495, %v493
    %v538 = vpack.c.b16 %v496, %v494
    %v539 = vpack.c.b16 %v499, %v497
    %v540 = vpack.c.b16 %v500, %v498
    %v541 = vpack.c.b16 %v503, %v501
    %v542 = vpack.c.b16 %v504, %v502
    %v543 = vpack.c.b16 %v507, %v505
    %v544 = vpack.c.b16 %v508, %v506
    %v545 = vpack.c.b16 %v511, %v509
    %v546 = vpack.c.b16 %v512, %v510
    %v547 = vpack.c.b16 %v515, %v513
    %v548 = vpack.c.b16 %v516, %v514
    %581 = vmatprep.subr.bf16.mxu0 %v518
    %582 = vmatpush1.bf16.msra.mxu0 %v517
    %583 = vmatprep.subr.bf16.mxu0 %v520
    %584 = vmatpush1.bf16.msra.mxu0 %v519
    %585 = vmatprep.subr.bf16.mxu0 %v522
    %586 = vmatpush1.bf16.msra.mxu0 %v521
    %587 = vmatprep.subr.bf16.mxu0 %v524
    %588 = vmatpush1.bf16.msra.mxu0 %v523
    %589 = vmatprep.subr.bf16.mxu0 %v526
    %590 = vmatpush1.bf16.msra.mxu0 %v525
    %591 = vmatprep.subr.bf16.mxu0 %v528
    %592 = vmatpush1.bf16.msra.mxu0 %v527
    %593 = vmatprep.subr.bf16.mxu0 %v530
    %594 = vmatpush1.bf16.msra.mxu0 %v529
    %595 = vmatprep.subr.bf16.mxu0 %v532
    %596 = vmatpush1.bf16.msra.mxu0 %v531
    %597 = vmatprep.subr.bf16.mxu0 %v534
    %598 = vmatpush1.bf16.msra.mxu0 %v533
    %599 = vmatprep.subr.bf16.mxu0 %v536
    %600 = vmatpush1.bf16.msra.mxu0 %v535
    %601 = vmatprep.subr.bf16.mxu0 %v538
    %602 = vmatpush1.bf16.msra.mxu0 %v537
    %603 = vmatprep.subr.bf16.mxu0 %v540
    %604 = vmatpush1.bf16.msra.mxu0 %v539
    %605 = vmatprep.subr.bf16.mxu0 %v542
    %606 = vmatpush1.bf16.msra.mxu0 %v541
    %607 = vmatprep.subr.bf16.mxu0 %v544
    %608 = vmatpush1.bf16.msra.mxu0 %v543
    %609 = vmatprep.subr.bf16.mxu0 %v546
    %610 = vmatpush1.bf16.msra.mxu0 %v545
    %611 = vmatprep.subr.bf16.mxu0 %v548
    %612 = vmatpush1.bf16.msra.mxu0 %v547
    %613 = vmatprep.mubr.bf16.mxu0 %v373
    %614 = vmatmul.mubr.bf16.gmra.mrb[0].mxu0 %v372
    %v615 = vpop.f32.mrb[0].mxu0
    %v616 = vadd.f32 %v414, %v615
    %v617 = vpop.f32.mrb[0].mxu0
    %v618 = vadd.f32 %v418, %v617
    %v619 = vpop.f32.mrb[0].mxu0
    %v620 = vpop.f32.mrb[0].mxu0
    %621 = vdwg.mxu0
    %v622 = vtanh.pop %v616
    %v623 = vtanh.pop %v618
    %v624 = vld [vmem:[#allocation7 + $0x100] sm:$0xff]
    %v625 = vld [vmem:[#allocation7 + $0x108] sm:$0xff]
    %v626 = vld [vmem:[#allocation7 + $0x110] sm:$0xff]
    %v627 = vld [vmem:[#allocation7 + $0x118] sm:$0xff]
    %v628 = vld [vmem:[#allocation7 + $0x120] sm:$0xff]
    %v629 = vld [vmem:[#allocation7 + $0x128] sm:$0xff]
    %v630 = vld [vmem:[#allocation7 + $0x130] sm:$0xff]
    %v631 = vld [vmem:[#allocation7 + $0x138] sm:$0xff]
    %v632 = vld [vmem:[#allocation7 + $0x140] sm:$0xff]
    %v633 = vld [vmem:[#allocation7 + $0x148] sm:$0xff]
    %v634 = vld [vmem:[#allocation7 + $0x150] sm:$0xff]
    %v635 = vld [vmem:[#allocation7 + $0x158] sm:$0xff]
    %v636 = vld [vmem:[#allocation7 + $0x160] sm:$0xff]
    %v637 = vld [vmem:[#allocation7 + $0x168] sm:$0xff]
    %v638 = vld [vmem:[#allocation7 + $0x170] sm:$0xff]
    %v639 = vld [vmem:[#allocation7 + $0x178] sm:$0xff]
    %v640 = vld [vmem:[#allocation7 + $0x180] sm:$0xff]
    %v641 = vld [vmem:[#allocation7 + $0x188] sm:$0xff]
    %v642 = vld [vmem:[#allocation7 + $0x190] sm:$0xff]
    %v643 = vld [vmem:[#allocation7 + $0x198] sm:$0xff]
    %v644 = vld [vmem:[#allocation7 + $0x1a0] sm:$0xff]
    %v645 = vld [vmem:[#allocation7 + $0x1a8] sm:$0xff]
    %v646 = vld [vmem:[#allocation7 + $0x1b0] sm:$0xff]
    %v647 = vld [vmem:[#allocation7 + $0x1b8] sm:$0xff]
    %v648 = vld [vmem:[#allocation7 + $0x1c0] sm:$0xff]
    %v649 = vld [vmem:[#allocation7 + $0x1c8] sm:$0xff]
    %v650 = vld [vmem:[#allocation7 + $0x1d0] sm:$0xff]
    %v651 = vld [vmem:[#allocation7 + $0x1d8] sm:$0xff]
    %v652 = vld [vmem:[#allocation7 + $0x1e0] sm:$0xff]
    %v653 = vld [vmem:[#allocation7 + $0x1e8] sm:$0xff]
    %v654 = vld [vmem:[#allocation7 + $0x1f0] sm:$0xff]
    %v655 = vld [vmem:[#allocation7 + $0x1f8] sm:$0xff]
    %v657 = vlaneseq
    %v658 = vshrl.u32 %v657, 7
    %v659 = vsub.s32 0, %v658
    %v660 = vrot.slane %v377, %v659
    %v661 = vlaneseq
    %v662 = vshrl.u32 %v661, 7
    %v663 = vsub.s32 1, %v662
    %v664 = vrot.slane %v377, %v663
    %v699 = vunpack.c.l.b16 %v624
    %v700 = vunpack.c.h.b16 %v624
    %v701 = vunpack.c.l.b16 %v625
    %v702 = vunpack.c.h.b16 %v625
    %v703 = vunpack.c.l.b16 %v626
    %v704 = vunpack.c.h.b16 %v626
    %v705 = vunpack.c.l.b16 %v627
    %v706 = vunpack.c.h.b16 %v627
    %v707 = vunpack.c.l.b16 %v628
    %v708 = vunpack.c.h.b16 %v628
    %v709 = vunpack.c.l.b16 %v629
    %v710 = vunpack.c.h.b16 %v629
    %v711 = vunpack.c.l.b16 %v630
    %v712 = vunpack.c.h.b16 %v630
    %v713 = vunpack.c.l.b16 %v631
    %v714 = vunpack.c.h.b16 %v631
    %v715 = vunpack.c.l.b16 %v632
    %v716 = vunpack.c.h.b16 %v632
    %v717 = vunpack.c.l.b16 %v633
    %v718 = vunpack.c.h.b16 %v633
    %v719 = vunpack.c.l.b16 %v634
    %v720 = vunpack.c.h.b16 %v634
    %v721 = vunpack.c.l.b16 %v635
    %v722 = vunpack.c.h.b16 %v635
    %v723 = vunpack.c.l.b16 %v636
    %v724 = vunpack.c.h.b16 %v636
    %v725 = vunpack.c.l.b16 %v637
    %v726 = vunpack.c.h.b16 %v637
    %v727 = vunpack.c.l.b16 %v638
    %v728 = vunpack.c.h.b16 %v638
    %v729 = vunpack.c.l.b16 %v639
    %v730 = vunpack.c.h.b16 %v639
    %v731 = vunpack.c.l.b16 %v640
    %v732 = vunpack.c.h.b16 %v640
    %v733 = vunpack.c.l.b16 %v641
    %v734 = vunpack.c.h.b16 %v641
    %v735 = vunpack.c.l.b16 %v642
    %v736 = vunpack.c.h.b16 %v642
    %v737 = vunpack.c.l.b16 %v643
    %v738 = vunpack.c.h.b16 %v643
    %v739 = vunpack.c.l.b16 %v644
    %v740 = vunpack.c.h.b16 %v644
    %v741 = vunpack.c.l.b16 %v645
    %v742 = vunpack.c.h.b16 %v645
    %v743 = vunpack.c.l.b16 %v646
    %v744 = vunpack.c.h.b16 %v646
    %v745 = vunpack.c.l.b16 %v647
    %v746 = vunpack.c.h.b16 %v647
    %v747 = vunpack.c.l.b16 %v648
    %v748 = vunpack.c.h.b16 %v648
    %v749 = vunpack.c.l.b16 %v649
    %v750 = vunpack.c.h.b16 %v649
    %v751 = vunpack.c.l.b16 %v650
    %v752 = vunpack.c.h.b16 %v650
    %v753 = vunpack.c.l.b16 %v651
    %v754 = vunpack.c.h.b16 %v651
    %v755 = vunpack.c.l.b16 %v652
    %v756 = vunpack.c.h.b16 %v652
    %v757 = vunpack.c.l.b16 %v653
    %v758 = vunpack.c.h.b16 %v653
    %v759 = vunpack.c.l.b16 %v654
    %v760 = vunpack.c.h.b16 %v654
    %v761 = vunpack.c.l.b16 %v655
    %v762 = vunpack.c.h.b16 %v655
    %v763 = vpack.c.b16 %v701, %v699
    %v764 = vpack.c.b16 %v702, %v700
    %v765 = vpack.c.b16 %v705, %v703
    %v766 = vpack.c.b16 %v706, %v704
    %v767 = vpack.c.b16 %v709, %v707
    %v768 = vpack.c.b16 %v710, %v708
    %v769 = vpack.c.b16 %v713, %v711
    %v770 = vpack.c.b16 %v714, %v712
    %v771 = vpack.c.b16 %v717, %v715
    %v772 = vpack.c.b16 %v718, %v716
    %v773 = vpack.c.b16 %v721, %v719
    %v774 = vpack.c.b16 %v722, %v720
    %v775 = vpack.c.b16 %v725, %v723
    %v776 = vpack.c.b16 %v726, %v724
    %v777 = vpack.c.b16 %v729, %v727
    %v778 = vpack.c.b16 %v730, %v728
    %v779 = vpack.c.b16 %v733, %v731
    %v780 = vpack.c.b16 %v734, %v732
    %v781 = vpack.c.b16 %v737, %v735
    %v782 = vpack.c.b16 %v738, %v736
    %v783 = vpack.c.b16 %v741, %v739
    %v784 = vpack.c.b16 %v742, %v740
    %v785 = vpack.c.b16 %v745, %v743
    %v786 = vpack.c.b16 %v746, %v744
    %v787 = vpack.c.b16 %v749, %v747
    %v788 = vpack.c.b16 %v750, %v748
    %v789 = vpack.c.b16 %v753, %v751
    %v790 = vpack.c.b16 %v754, %v752
    %v791 = vpack.c.b16 %v757, %v755
    %v792 = vpack.c.b16 %v758, %v756
    %v793 = vpack.c.b16 %v761, %v759
    %v794 = vpack.c.b16 %v762, %v760
    %827 = vmatprep.subr.bf16.mxu0 %v764
    %828 = vmatpush1.bf16.msra.mxu0 %v763
    %829 = vmatprep.subr.bf16.mxu0 %v766
    %830 = vmatpush1.bf16.msra.mxu0 %v765
    %831 = vmatprep.subr.bf16.mxu0 %v768
    %832 = vmatpush1.bf16.msra.mxu0 %v767
    %833 = vmatprep.subr.bf16.mxu0 %v770
    %834 = vmatpush1.bf16.msra.mxu0 %v769
    %835 = vmatprep.subr.bf16.mxu0 %v772
    %836 = vmatpush1.bf16.msra.mxu0 %v771
    %837 = vmatprep.subr.bf16.mxu0 %v774
    %838 = vmatpush1.bf16.msra.mxu0 %v773
    %839 = vmatprep.subr.bf16.mxu0 %v776
    %840 = vmatpush1.bf16.msra.mxu0 %v775
    %841 = vmatprep.subr.bf16.mxu0 %v778
    %842 = vmatpush1.bf16.msra.mxu0 %v777
    %843 = vmatprep.subr.bf16.mxu0 %v780
    %844 = vmatpush1.bf16.msra.mxu0 %v779
    %845 = vmatprep.subr.bf16.mxu0 %v782
    %846 = vmatpush1.bf16.msra.mxu0 %v781
    %847 = vmatprep.subr.bf16.mxu0 %v784
    %848 = vmatpush1.bf16.msra.mxu0 %v783
    %849 = vmatprep.subr.bf16.mxu0 %v786
    %850 = vmatpush1.bf16.msra.mxu0 %v785
    %851 = vmatprep.subr.bf16.mxu0 %v788
    %852 = vmatpush1.bf16.msra.mxu0 %v787
    %853 = vmatprep.subr.bf16.mxu0 %v790
    %854 = vmatpush1.bf16.msra.mxu0 %v789
    %855 = vmatprep.subr.bf16.mxu0 %v792
    %856 = vmatpush1.bf16.msra.mxu0 %v791
    %857 = vmatprep.subr.bf16.mxu0 %v794
    %858 = vmatpush1.bf16.msra.mxu0 %v793
    %859 = vmatprep.mubr.bf16.mxu0 %v375
    %860 = vmatmul.mubr.bf16.gmra.mrb[0].mxu0 %v374
    %v861 = vpop.f32.mrb[0].mxu0
    %v862 = vadd.f32 %v660, %v861
    %v863 = vpop.f32.mrb[0].mxu0
    %v864 = vadd.f32 %v664, %v863
    %v865 = vpop.f32.mrb[0].mxu0
    %v866 = vpop.f32.mrb[0].mxu0
    %867 = vdwg.mxu0
    %v868 = vtanh.pop %v862
    %v869 = vtanh.pop %v864
    %v870 = vld [vmem:[#allocation10 + $0x4] sm:$0x1]
    %v871 = vpack.c.bf16 %v622, %v622
    %v872 = vpack.c.bf16 %v623, %v623
    %v873 = vld [vmem:[#allocation8] sm:$0xf]
    %v874 = vld [vmem:[#allocation8 + $0x4] sm:$0xf]
    %v875 = vld [vmem:[#allocation8 + $0x8] sm:$0xf]
    %v876 = vld [vmem:[#allocation8 + $0xc] sm:$0xf]
    %v877 = vld [vmem:[#allocation8 + $0x10] sm:$0xf]
    %v878 = vld [vmem:[#allocation8 + $0x14] sm:$0xf]
    %v879 = vld [vmem:[#allocation8 + $0x18] sm:$0xf]
    %v880 = vld [vmem:[#allocation8 + $0x1c] sm:$0xf]
    %v881 = vld [vmem:[#allocation8 + $0x20] sm:$0xf]
    %v882 = vld [vmem:[#allocation8 + $0x24] sm:$0xf]
    %v883 = vld [vmem:[#allocation8 + $0x28] sm:$0xf]
    %v884 = vld [vmem:[#allocation8 + $0x2c] sm:$0xf]
    %v885 = vld [vmem:[#allocation8 + $0x30] sm:$0xf]
    %v886 = vld [vmem:[#allocation8 + $0x34] sm:$0xf]
    %v887 = vld [vmem:[#allocation8 + $0x38] sm:$0xf]
    %v888 = vld [vmem:[#allocation8 + $0x3c] sm:$0xf]
    %v889 = vld [vmem:[#allocation8 + $0x40] sm:$0xf]
    %v890 = vld [vmem:[#allocation8 + $0x44] sm:$0xf]
    %v891 = vld [vmem:[#allocation8 + $0x48] sm:$0xf]
    %v892 = vld [vmem:[#allocation8 + $0x4c] sm:$0xf]
    %v893 = vld [vmem:[#allocation8 + $0x50] sm:$0xf]
    %v894 = vld [vmem:[#allocation8 + $0x54] sm:$0xf]
    %v895 = vld [vmem:[#allocation8 + $0x58] sm:$0xf]
    %v896 = vld [vmem:[#allocation8 + $0x5c] sm:$0xf]
    %v897 = vld [vmem:[#allocation8 + $0x60] sm:$0xf]
    %v898 = vld [vmem:[#allocation8 + $0x64] sm:$0xf]
    %v899 = vld [vmem:[#allocation8 + $0x68] sm:$0xf]
    %v900 = vld [vmem:[#allocation8 + $0x6c] sm:$0xf]
    %v901 = vld [vmem:[#allocation8 + $0x70] sm:$0xf]
    %v902 = vld [vmem:[#allocation8 + $0x74] sm:$0xf]
    %v903 = vld [vmem:[#allocation8 + $0x78] sm:$0xf]
    %v904 = vld [vmem:[#allocation8 + $0x7c] sm:$0xf]
    %v905 = vpack.c.bf16 %v868, %v868
    %v906 = vpack.c.bf16 %v869, %v869
    %v907 = vld [vmem:[#allocation8 + $0x80] sm:$0xf]
    %v908 = vld [vmem:[#allocation8 + $0x84] sm:$0xf]
    %v909 = vld [vmem:[#allocation8 + $0x88] sm:$0xf]
    %v910 = vld [vmem:[#allocation8 + $0x8c] sm:$0xf]
    %v911 = vld [vmem:[#allocation8 + $0x90] sm:$0xf]
    %v912 = vld [vmem:[#allocation8 + $0x94] sm:$0xf]
    %v913 = vld [vmem:[#allocation8 + $0x98] sm:$0xf]
    %v914 = vld [vmem:[#allocation8 + $0x9c] sm:$0xf]
    %v915 = vld [vmem:[#allocation8 + $0xa0] sm:$0xf]
    %v916 = vld [vmem:[#allocation8 + $0xa4] sm:$0xf]
    %v917 = vld [vmem:[#allocation8 + $0xa8] sm:$0xf]
    %v918 = vld [vmem:[#allocation8 + $0xac] sm:$0xf]
    %v919 = vld [vmem:[#allocation8 + $0xb0] sm:$0xf]
    %v920 = vld [vmem:[#allocation8 + $0xb4] sm:$0xf]
    %v921 = vld [vmem:[#allocation8 + $0xb8] sm:$0xf]
    %v922 = vld [vmem:[#allocation8 + $0xbc] sm:$0xf]
    %v923 = vld [vmem:[#allocation8 + $0xc0] sm:$0xf]
    %v924 = vld [vmem:[#allocation8 + $0xc4] sm:$0xf]
    %v925 = vld [vmem:[#allocation8 + $0xc8] sm:$0xf]
    %v926 = vld [vmem:[#allocation8 + $0xcc] sm:$0xf]
    %v927 = vld [vmem:[#allocation8 + $0xd0] sm:$0xf]
    %v928 = vld [vmem:[#allocation8 + $0xd4] sm:$0xf]
    %v929 = vld [vmem:[#allocation8 + $0xd8] sm:$0xf]
    %v930 = vld [vmem:[#allocation8 + $0xdc] sm:$0xf]
    %v931 = vld [vmem:[#allocation8 + $0xe0] sm:$0xf]
    %v932 = vld [vmem:[#allocation8 + $0xe4] sm:$0xf]
    %v933 = vld [vmem:[#allocation8 + $0xe8] sm:$0xf]
    %v934 = vld [vmem:[#allocation8 + $0xec] sm:$0xf]
    %v935 = vld [vmem:[#allocation8 + $0xf0] sm:$0xf]
    %v936 = vld [vmem:[#allocation8 + $0xf4] sm:$0xf]
    %v937 = vld [vmem:[#allocation8 + $0xf8] sm:$0xf]
    %v938 = vld [vmem:[#allocation8 + $0xfc] sm:$0xf]
    %v971 = vunpack.c.l.b16 %v907
    %v972 = vunpack.c.l.b16 %v908
    %v973 = vunpack.c.l.b16 %v909
    %v974 = vunpack.c.l.b16 %v910
    %v975 = vunpack.c.l.b16 %v911
    %v976 = vunpack.c.l.b16 %v912
    %v977 = vunpack.c.l.b16 %v913
    %v978 = vunpack.c.l.b16 %v914
    %v979 = vunpack.c.l.b16 %v915
    %v980 = vunpack.c.l.b16 %v916
    %v981 = vunpack.c.l.b16 %v917
    %v982 = vunpack.c.l.b16 %v918
    %v983 = vunpack.c.l.b16 %v919
    %v984 = vunpack.c.l.b16 %v920
    %v985 = vunpack.c.l.b16 %v921
    %v986 = vunpack.c.l.b16 %v922
    %v987 = vunpack.c.l.b16 %v923
    %v988 = vunpack.c.l.b16 %v924
    %v989 = vunpack.c.l.b16 %v925
    %v990 = vunpack.c.l.b16 %v926
    %v991 = vunpack.c.l.b16 %v927
    %v992 = vunpack.c.l.b16 %v928
    %v993 = vunpack.c.l.b16 %v929
    %v994 = vunpack.c.l.b16 %v930
    %v995 = vunpack.c.l.b16 %v931
    %v996 = vunpack.c.l.b16 %v932
    %v997 = vunpack.c.l.b16 %v933
    %v998 = vunpack.c.l.b16 %v934
    %v999 = vunpack.c.l.b16 %v935
    %v1000 = vunpack.c.l.b16 %v936
    %v1001 = vunpack.c.l.b16 %v937
    %v1002 = vunpack.c.l.b16 %v938
    %v1003 = vpack.c.b16 %v972, %v971
    %v1004 = vpack.c.b16 %v974, %v973
    %v1005 = vpack.c.b16 %v976, %v975
    %v1006 = vpack.c.b16 %v978, %v977
    %v1007 = vpack.c.b16 %v980, %v979
    %v1008 = vpack.c.b16 %v982, %v981
    %v1009 = vpack.c.b16 %v984, %v983
    %v1010 = vpack.c.b16 %v986, %v985
    %v1011 = vpack.c.b16 %v988, %v987
    %v1012 = vpack.c.b16 %v990, %v989
    %v1013 = vpack.c.b16 %v992, %v991
    %v1014 = vpack.c.b16 %v994, %v993
    %v1015 = vpack.c.b16 %v996, %v995
    %v1016 = vpack.c.b16 %v998, %v997
    %v1017 = vpack.c.b16 %v1000, %v999
    %v1018 = vpack.c.b16 %v1002, %v1001
    %1035 = vmatprep.subr.bf16.mxu0 0
    %1036 = vmatpush1.bf16.msra.mxu0 %v1003
    %1037 = vmatprep.subr.bf16.mxu0 0
    %1038 = vmatpush1.bf16.msra.mxu0 %v1004
    %1039 = vmatprep.subr.bf16.mxu0 0
    %1040 = vmatpush1.bf16.msra.mxu0 %v1005
    %1041 = vmatprep.subr.bf16.mxu0 0
    %1042 = vmatpush1.bf16.msra.mxu0 %v1006
    %1043 = vmatprep.subr.bf16.mxu0 0
    %1044 = vmatpush1.bf16.msra.mxu0 %v1007
    %1045 = vmatprep.subr.bf16.mxu0 0
    %1046 = vmatpush1.bf16.msra.mxu0 %v1008
    %1047 = vmatprep.subr.bf16.mxu0 0
    %1048 = vmatpush1.bf16.msra.mxu0 %v1009
    %1049 = vmatprep.subr.bf16.mxu0 0
    %1050 = vmatpush1.bf16.msra.mxu0 %v1010
    %1051 = vmatprep.subr.bf16.mxu0 0
    %1052 = vmatpush1.bf16.msra.mxu0 %v1011
    %1053 = vmatprep.subr.bf16.mxu0 0
    %1054 = vmatpush1.bf16.msra.mxu0 %v1012
    %1055 = vmatprep.subr.bf16.mxu0 0
    %1056 = vmatpush1.bf16.msra.mxu0 %v1013
    %1057 = vmatprep.subr.bf16.mxu0 0
    %1058 = vmatpush1.bf16.msra.mxu0 %v1014
    %1059 = vmatprep.subr.bf16.mxu0 0
    %1060 = vmatpush1.bf16.msra.mxu0 %v1015
    %1061 = vmatprep.subr.bf16.mxu0 0
    %1062 = vmatpush1.bf16.msra.mxu0 %v1016
    %1063 = vmatprep.subr.bf16.mxu0 0
    %1064 = vmatpush1.bf16.msra.mxu0 %v1017
    %1065 = vmatprep.subr.bf16.mxu0 0
    %1066 = vmatpush1.bf16.msra.mxu0 %v1018
    %1067 = vmatprep.mubr.bf16.mxu0 %v906
    %1068 = vmatmul.mubr.bf16.gmra.mrb[0].mxu0 %v905
    %v1069 = vpop.f32.mrb[0].mxu0
    %v1070 = vadd.f32 0.0, %v1069
    %v1071 = vpop.f32.mrb[0].mxu0
    %v1072 = vpop.f32.mrb[0].mxu0
    %v1073 = vpop.f32.mrb[0].mxu0
    %1074 = vdwg.mxu0
    %v1107 = vunpack.c.l.b16 %v873
    %v1108 = vunpack.c.l.b16 %v874
    %v1109 = vunpack.c.l.b16 %v875
    %v1110 = vunpack.c.l.b16 %v876
    %v1111 = vunpack.c.l.b16 %v877
    %v1112 = vunpack.c.l.b16 %v878
    %v1113 = vunpack.c.l.b16 %v879
    %v1114 = vunpack.c.l.b16 %v880
    %v1115 = vunpack.c.l.b16 %v881
    %v1116 = vunpack.c.l.b16 %v882
    %v1117 = vunpack.c.l.b16 %v883
    %v1118 = vunpack.c.l.b16 %v884
    %v1119 = vunpack.c.l.b16 %v885
    %v1120 = vunpack.c.l.b16 %v886
    %v1121 = vunpack.c.l.b16 %v887
    %v1122 = vunpack.c.l.b16 %v888
    %v1123 = vunpack.c.l.b16 %v889
    %v1124 = vunpack.c.l.b16 %v890
    %v1125 = vunpack.c.l.b16 %v891
    %v1126 = vunpack.c.l.b16 %v892
    %v1127 = vunpack.c.l.b16 %v893
    %v1128 = vunpack.c.l.b16 %v894
    %v1129 = vunpack.c.l.b16 %v895
    %v1130 = vunpack.c.l.b16 %v896
    %v1131 = vunpack.c.l.b16 %v897
    %v1132 = vunpack.c.l.b16 %v898
    %v1133 = vunpack.c.l.b16 %v899
    %v1134 = vunpack.c.l.b16 %v900
    %v1135 = vunpack.c.l.b16 %v901
    %v1136 = vunpack.c.l.b16 %v902
    %v1137 = vunpack.c.l.b16 %v903
    %v1138 = vunpack.c.l.b16 %v904
    %v1139 = vpack.c.b16 %v1108, %v1107
    %v1140 = vpack.c.b16 %v1110, %v1109
    %v1141 = vpack.c.b16 %v1112, %v1111
    %v1142 = vpack.c.b16 %v1114, %v1113
    %v1143 = vpack.c.b16 %v1116, %v1115
    %v1144 = vpack.c.b16 %v1118, %v1117
    %v1145 = vpack.c.b16 %v1120, %v1119
    %v1146 = vpack.c.b16 %v1122, %v1121
    %v1147 = vpack.c.b16 %v1124, %v1123
    %v1148 = vpack.c.b16 %v1126, %v1125
    %v1149 = vpack.c.b16 %v1128, %v1127
    %v1150 = vpack.c.b16 %v1130, %v1129
    %v1151 = vpack.c.b16 %v1132, %v1131
    %v1152 = vpack.c.b16 %v1134, %v1133
    %v1153 = vpack.c.b16 %v1136, %v1135
    %v1154 = vpack.c.b16 %v1138, %v1137
    %1171 = vmatprep.subr.bf16.mxu0 0
    %1172 = vmatpush1.bf16.msra.mxu0 %v1139
    %1173 = vmatprep.subr.bf16.mxu0 0
    %1174 = vmatpush1.bf16.msra.mxu0 %v1140
    %1175 = vmatprep.subr.bf16.mxu0 0
    %1176 = vmatpush1.bf16.msra.mxu0 %v1141
    %1177 = vmatprep.subr.bf16.mxu0 0
    %1178 = vmatpush1.bf16.msra.mxu0 %v1142
    %1179 = vmatprep.subr.bf16.mxu0 0
    %1180 = vmatpush1.bf16.msra.mxu0 %v1143
    %1181 = vmatprep.subr.bf16.mxu0 0
    %1182 = vmatpush1.bf16.msra.mxu0 %v1144
    %1183 = vmatprep.subr.bf16.mxu0 0
    %1184 = vmatpush1.bf16.msra.mxu0 %v1145
    %1185 = vmatprep.subr.bf16.mxu0 0
    %1186 = vmatpush1.bf16.msra.mxu0 %v1146
    %1187 = vmatprep.subr.bf16.mxu0 0
    %1188 = vmatpush1.bf16.msra.mxu0 %v1147
    %1189 = vmatprep.subr.bf16.mxu0 0
    %1190 = vmatpush1.bf16.msra.mxu0 %v1148
    %1191 = vmatprep.subr.bf16.mxu0 0
    %1192 = vmatpush1.bf16.msra.mxu0 %v1149
    %1193 = vmatprep.subr.bf16.mxu0 0
    %1194 = vmatpush1.bf16.msra.mxu0 %v1150
    %1195 = vmatprep.subr.bf16.mxu0 0
    %1196 = vmatpush1.bf16.msra.mxu0 %v1151
    %1197 = vmatprep.subr.bf16.mxu0 0
    %1198 = vmatpush1.bf16.msra.mxu0 %v1152
    %1199 = vmatprep.subr.bf16.mxu0 0
    %1200 = vmatpush1.bf16.msra.mxu0 %v1153
    %1201 = vmatprep.subr.bf16.mxu0 0
    %1202 = vmatpush1.bf16.msra.mxu0 %v1154
    %1203 = vmatprep.mubr.bf16.mxu0 %v872
    %1204 = vmatmul.mubr.bf16.gmra.mrb[0].mxu0 %v871
    %v1205 = vpop.f32.mrb[0].mxu0
    %v1206 = vadd.f32 %v1070, %v1205
    %v1207 = vpop.f32.mrb[0].mxu0
    %v1208 = vpop.f32.mrb[0].mxu0
    %v1209 = vpop.f32.mrb[0].mxu0
    %1210 = vdwg.mxu0
    %v1212 = vlaneseq
    %v1213 = vshrl.u32 %v1212, 7
    %v1214 = vsub.s32 0, %v1213
    %v1215 = vrot.slane %v870, %v1214
    %v1217 = vadd.f32 %v1206, %v1215
    %1218 = vst [vmem:[#allocation11] sm:$0xff] %v1217
    // Predicated region
    $region42: #{actor_critic_forward.1} parent=1 // pred_check
      _
    $region43: #{actor_critic_forward.1} parent=1 // pred_check_branch
      %1220 = sbr.rel (0) target = $region45
    $region44: #{actor_critic_forward.1} parent=1 // pred_region
      %s1222 = ssub.s32 128, 128
      %1223 = vsyncadd [#allocation4], %s1222
      %s1225 = sshll.u32 [#allocation11], 4
      %s1226 = int_to_ptr.vmem [resolvable:$true] %s1225
      %1228 = dma.vmem_to_hbm [thread:$0]  %s1226, 128, %s5, [#allocation4]
    $region45: #{actor_critic_forward.1} parent=1 // pred_fallthru
      _
    // Predicated region
    $region46: #{actor_critic_forward.1} parent=1 // pred_check
      _
    $region47: #{actor_critic_forward.1} parent=1 // pred_check_branch
      %1230 = sbr.rel (0) target = $region49
    $region48: #{actor_critic_forward.1} parent=1 // pred_region
      %1231 = dma.done [#allocation4], 128
    $region49: #{actor_critic_forward.1} parent=1 // pred_fallthru
      _
    %1232 = vsyncpa [#allocation3], 1
    %1233 = vsyncpa [#allocation6], 1
    %1234 = vsyncpa [#allocation9], 1
    %1235 = vsyncpa [#allocation4], 1

</llo_original>
